<compile_context>
chip_gen: v6e
topology: v6e:2x2x1
jax: 0.10.0
libtpu: 0.0.40
codegen_flags: <defaults>
</compile_context>

<pallas_src>
import jax
import jax.numpy as jnp
from jax.experimental import pallas as pl
from jax.experimental.pallas import tpu as pltpu


FEATURES = ("POI", "cat", "user", "hour", "day")
VOCAB_SIZE = {"POI": 40, "cat": 12, "user": 6, "hour": 24, "day": 7}


def _checkin_embedding_kernel(idx_ref, poi_ref, cat_ref, user_ref, hour_ref,
                              day_ref, o_ref):
    """One grid step: (TS, 5) int32 indices -> (TS, 5*E) concatenated embeddings.

    Each feature's lookup is a one-hot (TS, V) @ (V, E) matmul on the MXU.
    Index == padding_idx (zeroed last row) -> zero embedding, matching
    nn.Embedding(..., padding_idx=vocab).
    """
    # TODO(synk): torch.nn.Embedding raises on out-of-range indices; the
    # one-hot gather silently yields a zero row instead (inputs here are in
    # range, so behaviour is identical).
    idx = idx_ref[...]                                       # (TS, 5) int32
    ts = idx.shape[0]

    outs = []
    for f, t_ref in enumerate((poi_ref, cat_ref, user_ref, hour_ref, day_ref)):
        table = t_ref[...]                                   # (V_f + 1, E) f32
        v = table.shape[0]
        lane_iota = jax.lax.broadcasted_iota(jnp.int32, (ts, v), 1)
        onehot = (idx[:, f:f + 1] == lane_iota).astype(jnp.float32)  # (TS, V)
        outs.append(jnp.dot(onehot, table,
                            preferred_element_type=jnp.float32))     # (TS, E)

    # Single lane-dense store of the concatenated block (the torch.cat(..., 1)).
    o_ref[...] = jnp.concatenate(outs, axis=-1)


def checkin_embedding(feature_seq, tables, *, seq_tile=None):
    """feature_seq: (5, S) int32 (torch calling convention, feature-major).
    tables: tuple of 5 arrays (vocab_f + 1, E) f32, padding row zeroed.
    Returns (S, 5*E) f32."""
    num_feats, seq_len = feature_seq.shape
    assert num_feats == len(tables) == len(FEATURES)
    embed_size = tables[0].shape[1]
    out_width = num_feats * embed_size

    if seq_tile is None:
        seq_tile = seq_len if seq_len <= 256 else 256
    assert seq_len % seq_tile == 0, "pad the sequence to a multiple of seq_tile"
    grid = (seq_len // seq_tile,)

    # Present indices sequence-major (S, 5) so each feature column broadcasts
    # against the lane iota inside the kernel (tiny glue transpose).
    idx = feature_seq.T.astype(jnp.int32)

    table_specs = [pl.BlockSpec(t.shape, lambda i: (0, 0)) for t in tables]

    flops = 2 * seq_len * embed_size * sum(int(t.shape[0]) for t in tables)
    bytes_accessed = (idx.size * 4
                      + sum(int(t.size) for t in tables) * 4
                      + seq_len * out_width * 4)

    return pl.pallas_call(
        _checkin_embedding_kernel,
        out_shape=jax.ShapeDtypeStruct((seq_len, out_width), jnp.float32),
        grid=grid,
        in_specs=[pl.BlockSpec((seq_tile, num_feats), lambda i: (i, 0))]
                 + table_specs,
        out_specs=pl.BlockSpec((seq_tile, out_width), lambda i: (i, 0)),
        compiler_params=pltpu.CompilerParams(
            dimension_semantics=("parallel",)),
        cost_estimate=pl.CostEstimate(
            flops=flops, transcendentals=0, bytes_accessed=bytes_accessed),
    )(idx, *tables)


def init_checkin_embedding(key, f_embed_size, vocab_size):
    """5 tables (vocab_f + 1, E) with the padding row (index = vocab_f) zeroed,
    mirroring nn.Embedding(vocab_f + 1, E, padding_idx=vocab_f)."""
    tables = []
    for i, name in enumerate(FEATURES):
        k = jax.random.fold_in(key, i)
        v = vocab_size[name]
        t = jax.random.normal(k, (v + 1, f_embed_size), jnp.float32) * 0.1
        t = t.at[v].set(0.0)                 # padding_idx row is all zeros
        tables.append(t)
    return tuple(tables)


if __name__ == "__main__":
    EMBED = 32        # f_embed_size
    SEQ = 8           # check-in sequence length

    key = jax.random.PRNGKey(0)
    k_tab, k_idx = jax.random.split(key)

    tables = init_checkin_embedding(k_tab, EMBED, VOCAB_SIZE)

    # Feature-major indices (5, S); each row may include its padding id.
    rows = []
    for i, name in enumerate(FEATURES):
        k = jax.random.fold_in(k_idx, i)
        rows.append(jax.random.randint(
            k, (SEQ,), 0, VOCAB_SIZE[name] + 1, dtype=jnp.int32))
    feature_seq = jnp.stack(rows, axis=0)                    # (5, S)

    out = checkin_embedding(feature_seq, tables)
    out = jax.block_until_ready(out)

    # Plain-JAX reference: per-table lookup + concat along dim 1.
    ref = jnp.concatenate(
        [jnp.take(t, feature_seq[f], axis=0) for f, t in enumerate(tables)],
        axis=1)

    assert out.shape == (SEQ, len(FEATURES) * EMBED) and out.dtype == jnp.float32
    assert jnp.allclose(out, ref, atol=1e-3), float(jnp.abs(out - ref).max())
    print("KERNEL_OK")
</pallas_src>

<mosaic_0001>
module attributes {stable_mosaic.version = 11 : i64} {
  func.func @_checkin_embedding_kernel(%arg0: i32, %arg1: memref<8x5xi32, #tpu.memory_space<vmem>>, %arg2: memref<41x32xf32, #tpu.memory_space<vmem>>, %arg3: memref<13x32xf32, #tpu.memory_space<vmem>>, %arg4: memref<7x32xf32, #tpu.memory_space<vmem>>, %arg5: memref<25x32xf32, #tpu.memory_space<vmem>>, %arg6: memref<8x32xf32, #tpu.memory_space<vmem>>, %arg7: memref<8x160xf32, #tpu.memory_space<vmem>>) attributes {dimension_semantics = [#tpu.dimension_semantics<parallel>], iteration_bounds = array<i64: 1>, scalar_prefetch = 0 : i64, scratch_operands = 0 : i64, tpu.core_type = #tpu.core_type<tc>, window_params = [{transform_indices = @transform_0, window_bounds = array<i64: 8, 5>}, {pipeline_mode = #tpu.pipeline_mode<synchronous>, transform_indices = @transform_1, window_bounds = array<i64: 41, 32>}, {pipeline_mode = #tpu.pipeline_mode<synchronous>, transform_indices = @transform_2, window_bounds = array<i64: 13, 32>}, {pipeline_mode = #tpu.pipeline_mode<synchronous>, transform_indices = @transform_3, window_bounds = array<i64: 7, 32>}, {pipeline_mode = #tpu.pipeline_mode<synchronous>, transform_indices = @transform_4, window_bounds = array<i64: 25, 32>}, {pipeline_mode = #tpu.pipeline_mode<synchronous>, transform_indices = @transform_5, window_bounds = array<i64: 8, 32>}, {transform_indices = @transform_6, window_bounds = array<i64: 8, 160>}]} {
    %c0 = arith.constant 0 : index
    %c0_0 = arith.constant 0 : index
    %0 = vector.load %arg1[%c0, %c0_0] : memref<8x5xi32, #tpu.memory_space<vmem>>, vector<8x5xi32>
    %c0_1 = arith.constant 0 : index
    %c0_2 = arith.constant 0 : index
    %1 = vector.load %arg2[%c0_1, %c0_2] : memref<41x32xf32, #tpu.memory_space<vmem>>, vector<41x32xf32>
    %2 = tpu.iota {dimensions = array<i32: 1>} : vector<8x41xi32>
    %3 = vector.extract_strided_slice %0 {offsets = [0, 0], sizes = [8, 1], strides = [1, 1]} : vector<8x5xi32> to vector<8x1xi32>
    %4 = vector.broadcast %3 : vector<8x1xi32> to vector<8x41xi32>
    %5 = arith.cmpi eq, %4, %2 : vector<8x41xi32>
    %6 = arith.extui %5 : vector<8x41xi1> to vector<8x41xi32>
    %7 = arith.sitofp %6 : vector<8x41xi32> to vector<8x41xf32>
    %cst = arith.constant dense<0.000000e+00> : vector<8x32xf32>
    %8 = tpu.matmul %7, %1, %cst {dimension_numbers = #tpu.dot_dimension_numbers<[1], [0], [0], [1], [0, 0, 1, 1], [], []>} : vector<8x41xf32>, vector<41x32xf32>, vector<8x32xf32> -> vector<8x32xf32>
    %c0_3 = arith.constant 0 : index
    %c0_4 = arith.constant 0 : index
    %9 = vector.load %arg3[%c0_3, %c0_4] : memref<13x32xf32, #tpu.memory_space<vmem>>, vector<13x32xf32>
    %10 = tpu.iota {dimensions = array<i32: 1>} : vector<8x13xi32>
    %11 = vector.extract_strided_slice %0 {offsets = [0, 1], sizes = [8, 1], strides = [1, 1]} : vector<8x5xi32> to vector<8x1xi32>
    %12 = vector.broadcast %11 : vector<8x1xi32> to vector<8x13xi32>
    %13 = arith.cmpi eq, %12, %10 : vector<8x13xi32>
    %14 = arith.extui %13 : vector<8x13xi1> to vector<8x13xi32>
    %15 = arith.sitofp %14 : vector<8x13xi32> to vector<8x13xf32>
    %cst_5 = arith.constant dense<0.000000e+00> : vector<8x32xf32>
    %16 = tpu.matmul %15, %9, %cst_5 {dimension_numbers = #tpu.dot_dimension_numbers<[1], [0], [0], [1], [0, 0, 1, 1], [], []>} : vector<8x13xf32>, vector<13x32xf32>, vector<8x32xf32> -> vector<8x32xf32>
    %c0_6 = arith.constant 0 : index
    %c0_7 = arith.constant 0 : index
    %17 = vector.load %arg4[%c0_6, %c0_7] : memref<7x32xf32, #tpu.memory_space<vmem>>, vector<7x32xf32>
    %18 = tpu.iota {dimensions = array<i32: 1>} : vector<8x7xi32>
    %19 = vector.extract_strided_slice %0 {offsets = [0, 2], sizes = [8, 1], strides = [1, 1]} : vector<8x5xi32> to vector<8x1xi32>
    %20 = vector.broadcast %19 : vector<8x1xi32> to vector<8x7xi32>
    %21 = arith.cmpi eq, %20, %18 : vector<8x7xi32>
    %22 = arith.extui %21 : vector<8x7xi1> to vector<8x7xi32>
    %23 = arith.sitofp %22 : vector<8x7xi32> to vector<8x7xf32>
    %cst_8 = arith.constant dense<0.000000e+00> : vector<8x32xf32>
    %24 = tpu.matmul %23, %17, %cst_8 {dimension_numbers = #tpu.dot_dimension_numbers<[1], [0], [0], [1], [0, 0, 1, 1], [], []>} : vector<8x7xf32>, vector<7x32xf32>, vector<8x32xf32> -> vector<8x32xf32>
    %c0_9 = arith.constant 0 : index
    %c0_10 = arith.constant 0 : index
    %25 = vector.load %arg5[%c0_9, %c0_10] : memref<25x32xf32, #tpu.memory_space<vmem>>, vector<25x32xf32>
    %26 = tpu.iota {dimensions = array<i32: 1>} : vector<8x25xi32>
    %27 = vector.extract_strided_slice %0 {offsets = [0, 3], sizes = [8, 1], strides = [1, 1]} : vector<8x5xi32> to vector<8x1xi32>
    %28 = vector.broadcast %27 : vector<8x1xi32> to vector<8x25xi32>
    %29 = arith.cmpi eq, %28, %26 : vector<8x25xi32>
    %30 = arith.extui %29 : vector<8x25xi1> to vector<8x25xi32>
    %31 = arith.sitofp %30 : vector<8x25xi32> to vector<8x25xf32>
    %cst_11 = arith.constant dense<0.000000e+00> : vector<8x32xf32>
    %32 = tpu.matmul %31, %25, %cst_11 {dimension_numbers = #tpu.dot_dimension_numbers<[1], [0], [0], [1], [0, 0, 1, 1], [], []>} : vector<8x25xf32>, vector<25x32xf32>, vector<8x32xf32> -> vector<8x32xf32>
    %c0_12 = arith.constant 0 : index
    %c0_13 = arith.constant 0 : index
    %33 = vector.load %arg6[%c0_12, %c0_13] : memref<8x32xf32, #tpu.memory_space<vmem>>, vector<8x32xf32>
    %34 = tpu.iota {dimensions = array<i32: 1>} : vector<8x8xi32>
    %35 = vector.extract_strided_slice %0 {offsets = [0, 4], sizes = [8, 1], strides = [1, 1]} : vector<8x5xi32> to vector<8x1xi32>
    %36 = vector.broadcast %35 : vector<8x1xi32> to vector<8x8xi32>
    %37 = arith.cmpi eq, %36, %34 : vector<8x8xi32>
    %38 = arith.extui %37 : vector<8x8xi1> to vector<8x8xi32>
    %39 = arith.sitofp %38 : vector<8x8xi32> to vector<8x8xf32>
    %cst_14 = arith.constant dense<0.000000e+00> : vector<8x32xf32>
    %40 = tpu.matmul %39, %33, %cst_14 {dimension_numbers = #tpu.dot_dimension_numbers<[1], [0], [0], [1], [0, 0, 1, 1], [], []>} : vector<8x8xf32>, vector<8x32xf32>, vector<8x32xf32> -> vector<8x32xf32>
    %41 = tpu.concatenate %8, %16, %24, %32, %40 in 1 : vector<8x32xf32>, vector<8x32xf32>, vector<8x32xf32>, vector<8x32xf32>, vector<8x32xf32> -> vector<8x160xf32>
    %c0_15 = arith.constant 0 : index
    %c0_16 = arith.constant 0 : index
    %42 = vector.load %arg7[%c0_15, %c0_16] : memref<8x160xf32, #tpu.memory_space<vmem>>, vector<8x160xf32>
    tpu.vector_store %arg7[%c0_15, %c0_16], %41 {strides = array<i32>} : memref<8x160xf32, #tpu.memory_space<vmem>>, vector<8x160xf32>,
    return
  }
  func.func @transform_0(%arg0: i32) -> (i32, i32) {
    %c0_i32 = arith.constant 0 : i32
    %c0_i32_0 = arith.constant 0 : i32
    return %arg0, %c0_i32 : i32, i32
  }
  func.func @transform_1(%arg0: i32) -> (i32, i32) {
    %c0_i32 = arith.constant 0 : i32
    %c0_i32_0 = arith.constant 0 : i32
    %c0_i32_1 = arith.constant 0 : i32
    return %c0_i32, %c0_i32_0 : i32, i32
  }
  func.func @transform_2(%arg0: i32) -> (i32, i32) {
    %c0_i32 = arith.constant 0 : i32
    %c0_i32_0 = arith.constant 0 : i32
    %c0_i32_1 = arith.constant 0 : i32
    return %c0_i32, %c0_i32_0 : i32, i32
  }
  func.func @transform_3(%arg0: i32) -> (i32, i32) {
    %c0_i32 = arith.constant 0 : i32
    %c0_i32_0 = arith.constant 0 : i32
    %c0_i32_1 = arith.constant 0 : i32
    return %c0_i32, %c0_i32_0 : i32, i32
  }
  func.func @transform_4(%arg0: i32) -> (i32, i32) {
    %c0_i32 = arith.constant 0 : i32
    %c0_i32_0 = arith.constant 0 : i32
    %c0_i32_1 = arith.constant 0 : i32
    return %c0_i32, %c0_i32_0 : i32, i32
  }
  func.func @transform_5(%arg0: i32) -> (i32, i32) {
    %c0_i32 = arith.constant 0 : i32
    %c0_i32_0 = arith.constant 0 : i32
    %c0_i32_1 = arith.constant 0 : i32
    return %c0_i32, %c0_i32_0 : i32, i32
  }
  func.func @transform_6(%arg0: i32) -> (i32, i32) {
    %c0_i32 = arith.constant 0 : i32
    %c0_i32_0 = arith.constant 0 : i32
    return %arg0, %c0_i32 : i32, i32
  }
}

</mosaic_0001>

<llo_original>
// kernel: tpu_custom_call.1
$region0: #{tpu_custom_call.1}
  #allocation0 [shape = 'u32[]', space=smem, size = 0x4, offset = 0x4, fixed_abs, tag = 'smem constant byte address 0x4 - core index']
  #allocation1 [shape = 'u32[144,128]{1,0:T(1,128)}', space=vmem, size = 0x12000, scoped, tag = 'internal scratch']
  %s0 = inlined_call_operand.vmem [shape: s32[8,5], index: 0, kind: input, shape index: {}]
  %s1 = inlined_call_operand.vmem [shape: f32[41,32], index: 1, kind: input, shape index: {}]
  %s2 = inlined_call_operand.vmem [shape: f32[13,32], index: 2, kind: input, shape index: {}]
  %s3 = inlined_call_operand.vmem [shape: f32[7,32], index: 3, kind: input, shape index: {}]
  %s4 = inlined_call_operand.vmem [shape: f32[25,32], index: 4, kind: input, shape index: {}]
  %s5 = inlined_call_operand.vmem [shape: f32[8,32], index: 5, kind: input, shape index: {}]
  %s6 = inlined_call_operand.hbm [shape: f32[8,160], index: 6, kind: output, shape index: {}]
  %s7 = sld [smem:[#allocation0]]
  $region34: #{tpu_custom_call.1} parent=0
    _
  %s9 = ssub.s32 1, %s7
  %s10 = scalar_select 0, %s9, %s7
  $region1: #{tpu_custom_call.1} parent=0
    #allocation2 [shape = 'u8[8192]{0}', space=vmem, size = 0x2000, scoped, tag = 'output window, operand 0, single buffered']
    #allocation3 [shape = 's32[1]{0}', space=sflag, size = 0x4, scoped, tag = 'scoped memory for tpu_custom_call.1']
    %11 = vsyncpa [#allocation3], 0
    // Predicated region
    $region2: #{tpu_custom_call.1} parent=1 // pred_check
      _
    $region3: #{tpu_custom_call.1} parent=1 // pred_check_branch
      %13 = sbr.rel (0) target = $region5
    $region4: #{tpu_custom_call.1} parent=1 // pred_region
      _
    $region5: #{tpu_custom_call.1} parent=1 // pred_fallthru
      _
    // Predicated region
    $region6: #{tpu_custom_call.1} parent=1 // pred_check
      _
    $region7: #{tpu_custom_call.1} parent=1 // pred_check_branch
      %15 = sbr.rel (0) target = $region9
    $region8: #{tpu_custom_call.1} parent=1 // pred_region
      _
    $region9: #{tpu_custom_call.1} parent=1 // pred_fallthru
      _
    // Predicated region
    $region10: #{tpu_custom_call.1} parent=1 // pred_check
      _
    $region11: #{tpu_custom_call.1} parent=1 // pred_check_branch
      %17 = sbr.rel (0) target = $region13
    $region12: #{tpu_custom_call.1} parent=1 // pred_region
      _
    $region13: #{tpu_custom_call.1} parent=1 // pred_fallthru
      _
    // Predicated region
    $region14: #{tpu_custom_call.1} parent=1 // pred_check
      _
    $region15: #{tpu_custom_call.1} parent=1 // pred_check_branch
      %19 = sbr.rel (0) target = $region17
    $region16: #{tpu_custom_call.1} parent=1 // pred_region
      _
    $region17: #{tpu_custom_call.1} parent=1 // pred_fallthru
      _
    // Predicated region
    $region18: #{tpu_custom_call.1} parent=1 // pred_check
      _
    $region19: #{tpu_custom_call.1} parent=1 // pred_check_branch
      %21 = sbr.rel (0) target = $region21
    $region20: #{tpu_custom_call.1} parent=1 // pred_region
      _
    $region21: #{tpu_custom_call.1} parent=1 // pred_fallthru
      _
    // Predicated region
    $region22: #{tpu_custom_call.1} parent=1 // pred_check
      _
    $region23: #{tpu_custom_call.1} parent=1 // pred_check_branch
      %23 = sbr.rel (0) target = $region25
    $region24: #{tpu_custom_call.1} parent=1 // pred_region
      _
    $region25: #{tpu_custom_call.1} parent=1 // pred_fallthru
      _
    %v24 = vld [vmem:[%s0] sm:$0xff]
    %v25 = vld [vmem:[%s1] sm:$0xff]
    %v26 = vld [vmem:[%s1 + $0x8] sm:$0xff]
    %v27 = vld [vmem:[%s1 + $0x10] sm:$0xff]
    %v28 = vld [vmem:[%s1 + $0x18] sm:$0xff]
    %v29 = vld [vmem:[%s1 + $0x20] sm:$0xff]
    %v30 = vld [vmem:[%s1 + $0x28] sm:$0x1]
    %v31 = vlaneseq
    %v32 = vand.u32 %v31, 127
    %33 = vset.pattern.permute.xlu0 0
    %34 = vperm.xlu0 %33, %v24
    %v35 = vpop.permute.xlu0 %34
    %vm36 = vcmp.eq.s32.totalorder %v35, %v32
    %v37 = vsel %vm36, 1, 0
    %v38 = vcvt.s32.f32 %v37
    %vm39 = vcmask 334848
    %v41 = vsel %vm39, %v38, 0
    %vm43 = vcmask 1040384
    %v45 = vsel %vm43, %v30, 0
    %47 = vmatprep.subr.mxu0 0.0
    %48 = vmatpush1.msra.mxu0 0.0
    %49 = vmatprep.subr.mxu0 0.0
    %50 = vmatpush1.msra.mxu0 0.0
    %51 = vmatprep.subr.mxu0 0.0
    %52 = vmatpush1.msra.mxu0 0.0
    %53 = vmatprep.subr.mxu0 0.0
    %54 = vmatpush1.msra.mxu0 0.0
    %55 = vmatprep.subr.mxu0 0.0
    %56 = vmatpush1.msra.mxu0 0.0
    %57 = vmatprep.subr.mxu0 0.0
    %58 = vmatpush1.msra.mxu0 0.0
    %59 = vmatprep.subr.mxu0 0.0
    %60 = vmatpush1.msra.mxu0 0.0
    %61 = vmatprep.subr.mxu0 0.0
    %62 = vmatpush1.msra.mxu0 0.0
    %63 = vmatprep.subr.mxu0 0.0
    %64 = vmatpush1.msra.mxu0 0.0
    %65 = vmatprep.subr.mxu0 0.0
    %66 = vmatpush1.msra.mxu0 0.0
    %67 = vmatprep.subr.mxu0 0.0
    %68 = vmatpush1.msra.mxu0 %v45
    %69 = vmatprep.subr.mxu0 0.0
    %70 = vmatpush1.msra.mxu0 %v29
    %71 = vmatprep.subr.mxu0 0.0
    %72 = vmatpush1.msra.mxu0 %v28
    %73 = vmatprep.subr.mxu0 0.0
    %74 = vmatpush1.msra.mxu0 %v27
    %75 = vmatprep.subr.mxu0 0.0
    %76 = vmatpush1.msra.mxu0 %v26
    %77 = vmatprep.subr.mxu0 0.0
    %78 = vmatpush1.msra.mxu0 %v25
    %79 = vmatprep.subr.mxu0 0.0
    %80 = vmatpush2.msra.mxu0 0.0
    %81 = vmatprep.subr.mxu0 0.0
    %82 = vmatpush2.msra.mxu0 0.0
    %83 = vmatprep.subr.mxu0 0.0
    %84 = vmatpush2.msra.mxu0 0.0
    %85 = vmatprep.subr.mxu0 0.0
    %86 = vmatpush2.msra.mxu0 0.0
    %87 = vmatprep.subr.mxu0 0.0
    %88 = vmatpush2.msra.mxu0 0.0
    %89 = vmatprep.subr.mxu0 0.0
    %90 = vmatpush2.msra.mxu0 0.0
    %91 = vmatprep.subr.mxu0 0.0
    %92 = vmatpush2.msra.mxu0 0.0
    %93 = vmatprep.subr.mxu0 0.0
    %94 = vmatpush2.msra.mxu0 0.0
    %95 = vmatprep.subr.mxu0 0.0
    %96 = vmatpush2.msra.mxu0 0.0
    %97 = vmatprep.subr.mxu0 0.0
    %98 = vmatpush2.msra.mxu0 0.0
    %99 = vmatprep.subr.mxu0 0.0
    %100 = vmatpush2.msra.mxu0 0.0
    %101 = vmatprep.subr.mxu0 0.0
    %102 = vmatpush2.msra.mxu0 0.0
    %103 = vmatprep.subr.mxu0 0.0
    %104 = vmatpush2.msra.mxu0 0.0
    %105 = vmatprep.subr.mxu0 0.0
    %106 = vmatpush2.msra.mxu0 0.0
    %107 = vmatprep.subr.mxu0 0.0
    %108 = vmatpush2.msra.mxu0 0.0
    %109 = vmatprep.subr.mxu0 0.0
    %110 = vmatpush2.msra.mxu0 0.0
    %111 = vmatprep.mubr.f32.mxu0 0.0
    %112 = vmatmul.mubr.f32.gmra.mxu0 %v41
    %v113 = vpop.f32.mrf.mxu0
    %v114 = vadd.f32 0.0, %v113
    %v115 = vpop.f32.mrf.mxu0
    %116 = vdwg.mxu0
    %v117 = vld [vmem:[%s2] sm:$0xff]
    %v118 = vld [vmem:[%s2 + $0x8] sm:$0x1f]
    %119 = vset.pattern.permute.xlu0 1
    %120 = vperm.xlu0 %119, %v24
    %v121 = vpop.permute.xlu0 %120
    %vm122 = vcmp.eq.s32.totalorder %v121, %v32
    %v123 = vsel %vm122, 1, 0
    %v124 = vcvt.s32.f32 %v123
    %vm125 = vcmask 105472
    %v127 = vsel %vm125, %v124, 0
    %vm129 = vcmask 1044480
    %v131 = vsel %vm129, %v118, 0
    %133 = vmatprep.subr.mxu0 0.0
    %134 = vmatpush1.msra.mxu0 0.0
    %135 = vmatprep.subr.mxu0 0.0
    %136 = vmatpush1.msra.mxu0 0.0
    %137 = vmatprep.subr.mxu0 0.0
    %138 = vmatpush1.msra.mxu0 0.0
    %139 = vmatprep.subr.mxu0 0.0
    %140 = vmatpush1.msra.mxu0 0.0
    %141 = vmatprep.subr.mxu0 0.0
    %142 = vmatpush1.msra.mxu0 0.0
    %143 = vmatprep.subr.mxu0 0.0
    %144 = vmatpush1.msra.mxu0 0.0
    %145 = vmatprep.subr.mxu0 0.0
    %146 = vmatpush1.msra.mxu0 0.0
    %147 = vmatprep.subr.mxu0 0.0
    %148 = vmatpush1.msra.mxu0 0.0
    %149 = vmatprep.subr.mxu0 0.0
    %150 = vmatpush1.msra.mxu0 0.0
    %151 = vmatprep.subr.mxu0 0.0
    %152 = vmatpush1.msra.mxu0 0.0
    %153 = vmatprep.subr.mxu0 0.0
    %154 = vmatpush1.msra.mxu0 0.0
    %155 = vmatprep.subr.mxu0 0.0
    %156 = vmatpush1.msra.mxu0 0.0
    %157 = vmatprep.subr.mxu0 0.0
    %158 = vmatpush1.msra.mxu0 0.0
    %159 = vmatprep.subr.mxu0 0.0
    %160 = vmatpush1.msra.mxu0 0.0
    %161 = vmatprep.subr.mxu0 0.0
    %162 = vmatpush1.msra.mxu0 %v131
    %163 = vmatprep.subr.mxu0 0.0
    %164 = vmatpush1.msra.mxu0 %v117
    %165 = vmatprep.subr.mxu0 0.0
    %166 = vmatpush2.msra.mxu0 0.0
    %167 = vmatprep.subr.mxu0 0.0
    %168 = vmatpush2.msra.mxu0 0.0
    %169 = vmatprep.subr.mxu0 0.0
    %170 = vmatpush2.msra.mxu0 0.0
    %171 = vmatprep.subr.mxu0 0.0
    %172 = vmatpush2.msra.mxu0 0.0
    %173 = vmatprep.subr.mxu0 0.0
    %174 = vmatpush2.msra.mxu0 0.0
    %175 = vmatprep.subr.mxu0 0.0
    %176 = vmatpush2.msra.mxu0 0.0
    %177 = vmatprep.subr.mxu0 0.0
    %178 = vmatpush2.msra.mxu0 0.0
    %179 = vmatprep.subr.mxu0 0.0
    %180 = vmatpush2.msra.mxu0 0.0
    %181 = vmatprep.subr.mxu0 0.0
    %182 = vmatpush2.msra.mxu0 0.0
    %183 = vmatprep.subr.mxu0 0.0
    %184 = vmatpush2.msra.mxu0 0.0
    %185 = vmatprep.subr.mxu0 0.0
    %186 = vmatpush2.msra.mxu0 0.0
    %187 = vmatprep.subr.mxu0 0.0
    %188 = vmatpush2.msra.mxu0 0.0
    %189 = vmatprep.subr.mxu0 0.0
    %190 = vmatpush2.msra.mxu0 0.0
    %191 = vmatprep.subr.mxu0 0.0
    %192 = vmatpush2.msra.mxu0 0.0
    %193 = vmatprep.subr.mxu0 0.0
    %194 = vmatpush2.msra.mxu0 0.0
    %195 = vmatprep.subr.mxu0 0.0
    %196 = vmatpush2.msra.mxu0 0.0
    %197 = vmatprep.mubr.f32.mxu0 0.0
    %198 = vmatmul.mubr.f32.gmra.mxu0 %v127
    %v199 = vpop.f32.mrf.mxu0
    %v200 = vadd.f32 0.0, %v199
    %v201 = vpop.f32.mrf.mxu0
    %202 = vdwg.mxu0
    %v203 = vld [vmem:[%s3] sm:$0x7f]
    %204 = vset.pattern.permute.xlu0 2
    %205 = vperm.xlu0 %204, %v24
    %v206 = vpop.permute.xlu0 %205
    %vm207 = vcmp.eq.s32.totalorder %v206, %v32
    %v208 = vsel %vm207, 1, 0
    %v209 = vcvt.s32.f32 %v208
    %vm210 = vcmask 56320
    %v212 = vsel %vm210, %v209, 0
    %vm214 = vcmask 1046528
    %v216 = vsel %vm214, %v203, 0
    %218 = vmatprep.subr.mxu0 0.0
    %219 = vmatpush1.msra.mxu0 0.0
    %220 = vmatprep.subr.mxu0 0.0
    %221 = vmatpush1.msra.mxu0 0.0
    %222 = vmatprep.subr.mxu0 0.0
    %223 = vmatpush1.msra.mxu0 0.0
    %224 = vmatprep.subr.mxu0 0.0
    %225 = vmatpush1.msra.mxu0 0.0
    %226 = vmatprep.subr.mxu0 0.0
    %227 = vmatpush1.msra.mxu0 0.0
    %228 = vmatprep.subr.mxu0 0.0
    %229 = vmatpush1.msra.mxu0 0.0
    %230 = vmatprep.subr.mxu0 0.0
    %231 = vmatpush1.msra.mxu0 0.0
    %232 = vmatprep.subr.mxu0 0.0
    %233 = vmatpush1.msra.mxu0 0.0
    %234 = vmatprep.subr.mxu0 0.0
    %235 = vmatpush1.msra.mxu0 0.0
    %236 = vmatprep.subr.mxu0 0.0
    %237 = vmatpush1.msra.mxu0 0.0
    %238 = vmatprep.subr.mxu0 0.0
    %239 = vmatpush1.msra.mxu0 0.0
    %240 = vmatprep.subr.mxu0 0.0
    %241 = vmatpush1.msra.mxu0 0.0
    %242 = vmatprep.subr.mxu0 0.0
    %243 = vmatpush1.msra.mxu0 0.0
    %244 = vmatprep.subr.mxu0 0.0
    %245 = vmatpush1.msra.mxu0 0.0
    %246 = vmatprep.subr.mxu0 0.0
    %247 = vmatpush1.msra.mxu0 0.0
    %248 = vmatprep.subr.mxu0 0.0
    %249 = vmatpush1.msra.mxu0 %v216
    %250 = vmatprep.subr.mxu0 0.0
    %251 = vmatpush2.msra.mxu0 0.0
    %252 = vmatprep.subr.mxu0 0.0
    %253 = vmatpush2.msra.mxu0 0.0
    %254 = vmatprep.subr.mxu0 0.0
    %255 = vmatpush2.msra.mxu0 0.0
    %256 = vmatprep.subr.mxu0 0.0
    %257 = vmatpush2.msra.mxu0 0.0
    %258 = vmatprep.subr.mxu0 0.0
    %259 = vmatpush2.msra.mxu0 0.0
    %260 = vmatprep.subr.mxu0 0.0
    %261 = vmatpush2.msra.mxu0 0.0
    %262 = vmatprep.subr.mxu0 0.0
    %263 = vmatpush2.msra.mxu0 0.0
    %264 = vmatprep.subr.mxu0 0.0
    %265 = vmatpush2.msra.mxu0 0.0
    %266 = vmatprep.subr.mxu0 0.0
    %267 = vmatpush2.msra.mxu0 0.0
    %268 = vmatprep.subr.mxu0 0.0
    %269 = vmatpush2.msra.mxu0 0.0
    %270 = vmatprep.subr.mxu0 0.0
    %271 = vmatpush2.msra.mxu0 0.0
    %272 = vmatprep.subr.mxu0 0.0
    %273 = vmatpush2.msra.mxu0 0.0
    %274 = vmatprep.subr.mxu0 0.0
    %275 = vmatpush2.msra.mxu0 0.0
    %276 = vmatprep.subr.mxu0 0.0
    %277 = vmatpush2.msra.mxu0 0.0
    %278 = vmatprep.subr.mxu0 0.0
    %279 = vmatpush2.msra.mxu0 0.0
    %280 = vmatprep.subr.mxu0 0.0
    %281 = vmatpush2.msra.mxu0 0.0
    %282 = vmatprep.mubr.f32.mxu0 0.0
    %283 = vmatmul.mubr.f32.gmra.mxu0 %v212
    %v284 = vpop.f32.mrf.mxu0
    %v285 = vadd.f32 0.0, %v284
    %v286 = vpop.f32.mrf.mxu0
    %287 = vdwg.mxu0
    %v288 = vld [vmem:[%s4] sm:$0xff]
    %v289 = vld [vmem:[%s4 + $0x8] sm:$0xff]
    %v290 = vld [vmem:[%s4 + $0x10] sm:$0xff]
    %v291 = vld [vmem:[%s4 + $0x18] sm:$0x1]
    %292 = vset.pattern.permute.xlu0 3
    %293 = vperm.xlu0 %292, %v24
    %v294 = vpop.permute.xlu0 %293
    %vm295 = vcmp.eq.s32.totalorder %v294, %v32
    %v296 = vsel %vm295, 1, 0
    %v297 = vcvt.s32.f32 %v296
    %vm298 = vcmask 203776
    %v300 = vsel %vm298, %v297, 0
    %v303 = vsel %vm43, %v291, 0
    %305 = vmatprep.subr.mxu0 0.0
    %306 = vmatpush1.msra.mxu0 0.0
    %307 = vmatprep.subr.mxu0 0.0
    %308 = vmatpush1.msra.mxu0 0.0
    %309 = vmatprep.subr.mxu0 0.0
    %310 = vmatpush1.msra.mxu0 0.0
    %311 = vmatprep.subr.mxu0 0.0
    %312 = vmatpush1.msra.mxu0 0.0
    %313 = vmatprep.subr.mxu0 0.0
    %314 = vmatpush1.msra.mxu0 0.0
    %315 = vmatprep.subr.mxu0 0.0
    %316 = vmatpush1.msra.mxu0 0.0
    %317 = vmatprep.subr.mxu0 0.0
    %318 = vmatpush1.msra.mxu0 0.0
    %319 = vmatprep.subr.mxu0 0.0
    %320 = vmatpush1.msra.mxu0 0.0
    %321 = vmatprep.subr.mxu0 0.0
    %322 = vmatpush1.msra.mxu0 0.0
    %323 = vmatprep.subr.mxu0 0.0
    %324 = vmatpush1.msra.mxu0 0.0
    %325 = vmatprep.subr.mxu0 0.0
    %326 = vmatpush1.msra.mxu0 0.0
    %327 = vmatprep.subr.mxu0 0.0
    %328 = vmatpush1.msra.mxu0 0.0
    %329 = vmatprep.subr.mxu0 0.0
    %330 = vmatpush1.msra.mxu0 %v303
    %331 = vmatprep.subr.mxu0 0.0
    %332 = vmatpush1.msra.mxu0 %v290
    %333 = vmatprep.subr.mxu0 0.0
    %334 = vmatpush1.msra.mxu0 %v289
    %335 = vmatprep.subr.mxu0 0.0
    %336 = vmatpush1.msra.mxu0 %v288
    %337 = vmatprep.subr.mxu0 0.0
    %338 = vmatpush2.msra.mxu0 0.0
    %339 = vmatprep.subr.mxu0 0.0
    %340 = vmatpush2.msra.mxu0 0.0
    %341 = vmatprep.subr.mxu0 0.0
    %342 = vmatpush2.msra.mxu0 0.0
    %343 = vmatprep.subr.mxu0 0.0
    %344 = vmatpush2.msra.mxu0 0.0
    %345 = vmatprep.subr.mxu0 0.0
    %346 = vmatpush2.msra.mxu0 0.0
    %347 = vmatprep.subr.mxu0 0.0
    %348 = vmatpush2.msra.mxu0 0.0
    %349 = vmatprep.subr.mxu0 0.0
    %350 = vmatpush2.msra.mxu0 0.0
    %351 = vmatprep.subr.mxu0 0.0
    %352 = vmatpush2.msra.mxu0 0.0
    %353 = vmatprep.subr.mxu0 0.0
    %354 = vmatpush2.msra.mxu0 0.0
    %355 = vmatprep.subr.mxu0 0.0
    %356 = vmatpush2.msra.mxu0 0.0
    %357 = vmatprep.subr.mxu0 0.0
    %358 = vmatpush2.msra.mxu0 0.0
    %359 = vmatprep.subr.mxu0 0.0
    %360 = vmatpush2.msra.mxu0 0.0
    %361 = vmatprep.subr.mxu0 0.0
    %362 = vmatpush2.msra.mxu0 0.0
    %363 = vmatprep.subr.mxu0 0.0
    %364 = vmatpush2.msra.mxu0 0.0
    %365 = vmatprep.subr.mxu0 0.0
    %366 = vmatpush2.msra.mxu0 0.0
    %367 = vmatprep.subr.mxu0 0.0
    %368 = vmatpush2.msra.mxu0 0.0
    %369 = vmatprep.mubr.f32.mxu0 0.0
    %370 = vmatmul.mubr.f32.gmra.mxu0 %v300
    %v371 = vpop.f32.mrf.mxu0
    %v372 = vadd.f32 0.0, %v371
    %v373 = vpop.f32.mrf.mxu0
    %374 = vdwg.mxu0
    %v375 = vld [vmem:[%s5] sm:$0xff]
    %376 = vset.pattern.permute.xlu0 4
    %377 = vperm.xlu0 %376, %v24
    %v378 = vpop.permute.xlu0 %377
    %vm379 = vcmp.eq.s32.totalorder %v378, %v32
    %v380 = vsel %vm379, 1, 0
    %v381 = vcvt.s32.f32 %v380
    %vm382 = vcmask 64512
    %v384 = vsel %vm382, %v381, 0
    %386 = vmatprep.subr.mxu0 0.0
    %387 = vmatpush1.msra.mxu0 0.0
    %388 = vmatprep.subr.mxu0 0.0
    %389 = vmatpush1.msra.mxu0 0.0
    %390 = vmatprep.subr.mxu0 0.0
    %391 = vmatpush1.msra.mxu0 0.0
    %392 = vmatprep.subr.mxu0 0.0
    %393 = vmatpush1.msra.mxu0 0.0
    %394 = vmatprep.subr.mxu0 0.0
    %395 = vmatpush1.msra.mxu0 0.0
    %396 = vmatprep.subr.mxu0 0.0
    %397 = vmatpush1.msra.mxu0 0.0
    %398 = vmatprep.subr.mxu0 0.0
    %399 = vmatpush1.msra.mxu0 0.0
    %400 = vmatprep.subr.mxu0 0.0
    %401 = vmatpush1.msra.mxu0 0.0
    %402 = vmatprep.subr.mxu0 0.0
    %403 = vmatpush1.msra.mxu0 0.0
    %404 = vmatprep.subr.mxu0 0.0
    %405 = vmatpush1.msra.mxu0 0.0
    %406 = vmatprep.subr.mxu0 0.0
    %407 = vmatpush1.msra.mxu0 0.0
    %408 = vmatprep.subr.mxu0 0.0
    %409 = vmatpush1.msra.mxu0 0.0
    %410 = vmatprep.subr.mxu0 0.0
    %411 = vmatpush1.msra.mxu0 0.0
    %412 = vmatprep.subr.mxu0 0.0
    %413 = vmatpush1.msra.mxu0 0.0
    %414 = vmatprep.subr.mxu0 0.0
    %415 = vmatpush1.msra.mxu0 0.0
    %416 = vmatprep.subr.mxu0 0.0
    %417 = vmatpush1.msra.mxu0 %v375
    %418 = vmatprep.subr.mxu0 0.0
    %419 = vmatpush2.msra.mxu0 0.0
    %420 = vmatprep.subr.mxu0 0.0
    %421 = vmatpush2.msra.mxu0 0.0
    %422 = vmatprep.subr.mxu0 0.0
    %423 = vmatpush2.msra.mxu0 0.0
    %424 = vmatprep.subr.mxu0 0.0
    %425 = vmatpush2.msra.mxu0 0.0
    %426 = vmatprep.subr.mxu0 0.0
    %427 = vmatpush2.msra.mxu0 0.0
    %428 = vmatprep.subr.mxu0 0.0
    %429 = vmatpush2.msra.mxu0 0.0
    %430 = vmatprep.subr.mxu0 0.0
    %431 = vmatpush2.msra.mxu0 0.0
    %432 = vmatprep.subr.mxu0 0.0
    %433 = vmatpush2.msra.mxu0 0.0
    %434 = vmatprep.subr.mxu0 0.0
    %435 = vmatpush2.msra.mxu0 0.0
    %436 = vmatprep.subr.mxu0 0.0
    %437 = vmatpush2.msra.mxu0 0.0
    %438 = vmatprep.subr.mxu0 0.0
    %439 = vmatpush2.msra.mxu0 0.0
    %440 = vmatprep.subr.mxu0 0.0
    %441 = vmatpush2.msra.mxu0 0.0
    %442 = vmatprep.subr.mxu0 0.0
    %443 = vmatpush2.msra.mxu0 0.0
    %444 = vmatprep.subr.mxu0 0.0
    %445 = vmatpush2.msra.mxu0 0.0
    %446 = vmatprep.subr.mxu0 0.0
    %447 = vmatpush2.msra.mxu0 0.0
    %448 = vmatprep.subr.mxu0 0.0
    %449 = vmatpush2.msra.mxu0 0.0
    %450 = vmatprep.mubr.f32.mxu0 0.0
    %451 = vmatmul.mubr.f32.gmra.mxu0 %v384
    %v452 = vpop.f32.mrf.mxu0
    %v453 = vadd.f32 0.0, %v452
    %v454 = vpop.f32.mrf.mxu0
    %455 = vdwg.mxu0
    %457 = vrot.lane.b32.xlu0 %v200, 32
    %v458 = vpop.permute.xlu0 %457
    %461 = vrot.lane.b32.xlu0 %v285, 64
    %v462 = vpop.permute.xlu0 %461
    %465 = vrot.lane.b32.xlu0 %v372, 96
    %v466 = vpop.permute.xlu0 %465
    %vm468 = vcmask 261120
    %v469 = vsel %vm468, %v114, %v458
    %vm470 = vcmask 523264
    %v471 = vsel %vm470, %v469, %v462
    %vm472 = vcmask 785408
    %v473 = vsel %vm472, %v471, %v466
    %474 = vst [vmem:[#allocation2] sm:$0xff] %v473
    %475 = vst.msk [vmem:[#allocation2 + $0x8] sm:$0xff] %vm468, %v453
    // Predicated region
    $region26: #{tpu_custom_call.1} parent=1 // pred_check
      _
    $region27: #{tpu_custom_call.1} parent=1 // pred_check_branch
      %477 = sbr.rel (0) target = $region29
    $region28: #{tpu_custom_call.1} parent=1 // pred_region
      %s479 = ssub.s32 256, 256
      %480 = vsyncadd [#allocation3], %s479
      %s482 = sshll.u32 [#allocation2], 4
      %s483 = int_to_ptr.vmem [resolvable:$true] %s482
      %485 = dma.vmem_to_hbm [thread:$0]  %s483, 256, %s6, [#allocation3]
    $region29: #{tpu_custom_call.1} parent=1 // pred_fallthru
      _
    // Predicated region
    $region30: #{tpu_custom_call.1} parent=1 // pred_check
      _
    $region31: #{tpu_custom_call.1} parent=1 // pred_check_branch
      %487 = sbr.rel (0) target = $region33
    $region32: #{tpu_custom_call.1} parent=1 // pred_region
      %488 = dma.done [#allocation3], 256
    $region33: #{tpu_custom_call.1} parent=1 // pred_fallthru
      _
    %489 = vsyncpa [#allocation3], 1

</llo_original>
